<compile_context>
chip_gen: v6e
topology: v6e:2x2x1
jax: 0.10.0
libtpu: 0.0.40
codegen_flags: <defaults>
</compile_context>

<pallas_src>
import functools

import jax
import jax.numpy as jnp
from jax.experimental import pallas as pl
from jax.experimental.pallas import tpu as pltpu


# Max concurrently in-flight DMAs for the in-place scatter kernel.
_MAX_INFLIGHT_DMAS = 4
# VMEM budget for the in-place kernel's broadcast-ctx DMA source (fits every chip).
_SCATTER_SCRATCH_BUDGET = 8 * 1024 * 1024


def _vmem_budgets():
    """Return (vmem_limit_bytes, per-step working-set budget), gated per chip."""
    phys = None
    try:
        info = pltpu.get_tpu_info()
        for name in ("vmem_capacity_bytes", "vmem_size_bytes", "vmem_bytes"):
            val = getattr(info, name, None)
            if val:
                phys = int(val)
                break
    except Exception:
        phys = None
    if not phys:
        phys = 64 * 1024 * 1024  # conservative default: v7x per-TC VMEM
    # Scoped limit: 3/4 of physical, capped at 96 MiB (v5e/v6e), floored at 32 MiB.
    limit = max(32 * 1024 * 1024, min((phys * 3) // 4, 96 * 1024 * 1024))
    # Per-step working set (double-buffered inputs + output tile): half the limit.
    budget = limit // 2
    return limit, budget


# ---------------------------------------------------------------------------
# Kernel 1 (production): in-place ctx scatter into the aliased prompt embedding
# ---------------------------------------------------------------------------
def _ctx_scatter_kernel(prompts_ref, ctx_ref, out_ref, bcast_ref, sems,
                        *, cls_tile, num_full, rem, n_ctx):
    # prompts_ref : (n_cls, total, D) in HBM, aliased to out_ref -- never read.
    # ctx_ref     : (n_ctx, D) in VMEM (the only HBM read of this kernel).
    # out_ref     : (n_cls, total, D) in HBM (same buffer as prompts_ref).
    # bcast_ref   : (cls_tile, n_ctx, D) VMEM scratch -- shared DMA source.
    # sems        : shaped DMA semaphores, rotating pool of size <= _MAX_INFLIGHT_DMAS.
    del prompts_ref

    # Build the shared DMA source once: cast FIRST, then broadcast (cheap).
    bcast_ref[...] = jnp.broadcast_to(
        ctx_ref[...].astype(bcast_ref.dtype)[None, :, :], bcast_ref.shape)

    num_tiles = num_full + (1 if rem else 0)
    n_sems = min(num_tiles, _MAX_INFLIGHT_DMAS)
    inflight = [None] * n_sems

    # Issue every tile's strided write-DMA back-to-back (bounded by the sem
    # pool); the source never changes so no double-buffering is needed. All
    # tile/offset arithmetic is static Python, so the loop fully unrolls.
    for t in range(num_tiles):
        slot = t % n_sems
        if inflight[slot] is not None:
            inflight[slot].wait()          # recycle this semaphore slot
        rows = cls_tile if t < num_full else rem
        cp = pltpu.make_async_copy(
            bcast_ref.at[pl.ds(0, rows)],
            out_ref.at[pl.ds(t * cls_tile, rows), pl.ds(1, n_ctx), :],
            sems.at[slot],
        )
        cp.start()
        inflight[slot] = cp

    for cp in inflight:                     # final drain
        if cp is not None:
            cp.wait()


def prompt_learner_forward_inplace(ctx, prompt_embedding, *, max_cls_per_tile=None):
    """Bandwidth-optimal 'end' forward.

    `prompt_embedding` is the full clip_model.token_embedding(tokenized_prompts)
    tensor (n_cls, total, D); token slots [1, 1+n_ctx) (the 'X X ... X'
    placeholders) are overwritten with the learned ctx; prefix/suffix bytes are
    never read nor re-written. The caller MUST donate `prompt_embedding`
    (jax.jit donate_argnums) so input_output_aliases avoids a defensive copy.
    """
    n_ctx, d = ctx.shape
    n_cls, total, d2 = prompt_embedding.shape
    assert d == d2 and total >= 1 + n_ctx
    out_dtype = prompt_embedding.dtype
    itemsize = jnp.dtype(out_dtype).itemsize

    # Size the broadcast scratch (shared DMA source); fits every generation.
    per_class = n_ctx * d * itemsize
    cls_tile = max(1, min(n_cls, _SCATTER_SCRATCH_BUDGET // per_class))
    if max_cls_per_tile is not None:
        cls_tile = max(1, min(cls_tile, int(max_cls_per_tile)))
    num_full, rem = divmod(n_cls, cls_tile)
    num_tiles = num_full + (1 if rem else 0)
    n_sems = min(num_tiles, _MAX_INFLIGHT_DMAS)

    vmem_limit, _ = _vmem_budgets()
    kernel = functools.partial(_ctx_scatter_kernel, cls_tile=cls_tile,
                               num_full=num_full, rem=rem, n_ctx=n_ctx)

    return pl.pallas_call(
        kernel,
        out_shape=jax.ShapeDtypeStruct(prompt_embedding.shape, out_dtype),
        grid=(1,),
        in_specs=[
            pl.BlockSpec(memory_space=pl.ANY),           # aliased prompts buffer (HBM)
            pl.BlockSpec((n_ctx, d), lambda i: (0, 0)),  # raw ctx -> VMEM (no wrapper bcast)
        ],
        out_specs=pl.BlockSpec(memory_space=pl.ANY),
        scratch_shapes=[
            pltpu.VMEM((cls_tile, n_ctx, d), out_dtype),
            pltpu.SemaphoreType.DMA((n_sems,)),
        ],
        input_output_aliases={0: 0},
        compiler_params=pltpu.CompilerParams(
            dimension_semantics=("arbitrary",),
            vmem_limit_bytes=vmem_limit,
        ),
    )(prompt_embedding, ctx)


# ---------------------------------------------------------------------------
# Kernel 2 (fallback): tiled concat from the module's prefix/suffix buffers
# ---------------------------------------------------------------------------
def _prompt_cat_kernel(prefix_ref, ctx_ref, suffix_ref, out_ref):
    # prefix_ref : (CLS_TILE, 1, D)
    # ctx_ref    : (n_ctx, D)  -- constant block, stays VMEM-resident
    # suffix_ref : (CLS_TILE, S, D)
    # out_ref    : (CLS_TILE, 1 + n_ctx + S, D)
    cls_tile = out_ref.shape[0]
    n_ctx, d = ctx_ref.shape
    # Three direct region stores; suffix (the bulk of the bytes) passes straight
    # through instead of being staged inside a full-tile concatenate.
    out_ref[:, 0:1, :] = prefix_ref[...].astype(out_ref.dtype)
    out_ref[:, 1:1 + n_ctx, :] = jnp.broadcast_to(
        ctx_ref[...].astype(out_ref.dtype)[None, :, :], (cls_tile, n_ctx, d))
    out_ref[:, 1 + n_ctx:, :] = suffix_ref[...].astype(out_ref.dtype)


def prompt_learner_forward(ctx, token_prefix, token_suffix):
    """'end' layout: cat([prefix, ctx.expand(n_cls, -1, -1), suffix], dim=1)."""
    n_ctx, d = ctx.shape
    n_cls, one, d_p = token_prefix.shape
    suf_len = token_suffix.shape[1]
    assert one == 1 and d_p == d and token_suffix.shape[2] == d
    total = 1 + n_ctx + suf_len
    out_dtype = token_prefix.dtype  # dtype policy: follow the embeddings

    vmem_limit, tile_budget = _vmem_budgets()
    itemsize = jnp.dtype(out_dtype).itemsize
    # Double-buffered prefix+suffix inputs and the output tile, per class.
    per_class = 2 * (1 + suf_len + total) * d * itemsize
    cls_tile = max(1, min(n_cls, tile_budget // per_class))
    if n_cls >= 2:
        # Keep >=2 grid steps so megacore (v7x) can shard the class axis.
        cls_tile = min(cls_tile, pl.cdiv(n_cls, 2))
    grid = (pl.cdiv(n_cls, cls_tile),)  # ragged tail handled by Pallas

    return pl.pallas_call(
        _prompt_cat_kernel,
        out_shape=jax.ShapeDtypeStruct((n_cls, total, d), out_dtype),
        grid=grid,
        in_specs=[
            pl.BlockSpec((cls_tile, 1, d), lambda i: (i, 0, 0)),        # prefix tile
            pl.BlockSpec((n_ctx, d), lambda i: (0, 0)),                 # shared ctx (const)
            pl.BlockSpec((cls_tile, suf_len, d), lambda i: (i, 0, 0)),  # suffix tile
        ],
        out_specs=pl.BlockSpec((cls_tile, total, d), lambda i: (i, 0, 0)),
        compiler_params=pltpu.CompilerParams(
            dimension_semantics=("parallel",),
            vmem_limit_bytes=vmem_limit,
        ),
    )(token_prefix, ctx, token_suffix)


if __name__ == "__main__":
    # Small shapes consistent with the module: n_ctx=8 learned context tokens,
    # lane-dense embedding dim (CLIP uses 512; 128 here), total sequence 24.
    # n_cls=5 is deliberately odd so the ragged tail paths are exercised.
    n_cls = 5
    n_ctx = 8
    ctx_dim = 128
    total_seq = 24
    suf_len = total_seq - 1 - n_ctx

    key = jax.random.PRNGKey(0)
    k_ctx, k_emb = jax.random.split(key)

    # nn.init.normal_(ctx_vectors, std=0.02)  (generic context, CSC=False)
    ctx = 0.02 * jax.random.normal(k_ctx, (n_ctx, ctx_dim), dtype=jnp.float32)
    # Stand-in for clip_model.token_embedding(tokenized_prompts): (n_cls, total, D).
    embedding = jax.random.normal(k_emb, (n_cls, total_seq, ctx_dim), dtype=jnp.float32)
    token_prefix = embedding[:, :1, :]
    token_suffix = embedding[:, 1 + n_ctx:, :]

    # Pure-JAX reference (class_token_position == 'end').
    ref = jnp.concatenate(
        [token_prefix,
         jnp.broadcast_to(ctx[None, :, :], (n_cls, n_ctx, ctx_dim)),
         token_suffix],
        axis=1,
    )

    # 1) Fallback concat kernel (module-buffer interface, ragged class tail).
    prompts_cat = jax.block_until_ready(
        prompt_learner_forward(ctx, token_prefix, token_suffix))
    assert prompts_cat.shape == (n_cls, total_seq, ctx_dim), prompts_cat.shape
    assert prompts_cat.dtype == jnp.float32
    assert jnp.allclose(prompts_cat, ref), "concat kernel mismatch vs reference"

    # 2) Production in-place kernel (donate the embedding so the alias is real).
    fwd_inplace = jax.jit(prompt_learner_forward_inplace, donate_argnums=(1,))
    out_ip = jax.block_until_ready(fwd_inplace(ctx, jnp.array(embedding, copy=True)))
    assert out_ip.shape == (n_cls, total_seq, ctx_dim) and out_ip.dtype == jnp.float32
    assert jnp.allclose(out_ip, ref), "in-place kernel mismatch vs reference"

    # 2b) Force a remainder tile (num_full=2, rem=1).
    fwd_rem = jax.jit(
        functools.partial(prompt_learner_forward_inplace, max_cls_per_tile=2),
        donate_argnums=(1,))
    out_rem = jax.block_until_ready(fwd_rem(ctx, jnp.array(embedding, copy=True)))
    assert jnp.allclose(out_rem, ref), "in-place kernel (rem tile) mismatch"

    # 2c) Force more tiles than DMA semaphores (exercises the rotating sem pool).
    fwd_rot = jax.jit(
        functools.partial(prompt_learner_forward_inplace, max_cls_per_tile=1),
        donate_argnums=(1,))
    out_rot = jax.block_until_ready(fwd_rot(ctx, jnp.array(embedding, copy=True)))
    assert jnp.allclose(out_rot, ref), "in-place kernel (sem reuse) mismatch"

    print("KERNEL_OK")
</pallas_src>

<mosaic_0001>
module attributes {stable_mosaic.version = 11 : i64} {
  func.func @_prompt_cat_kernel(%arg0: i32, %arg1: memref<3x1x128xf32, #tpu.memory_space<vmem>>, %arg2: memref<8x128xf32, #tpu.memory_space<vmem>>, %arg3: memref<3x15x128xf32, #tpu.memory_space<vmem>>, %arg4: memref<3x24x128xf32, #tpu.memory_space<vmem>>) attributes {dimension_semantics = [#tpu.dimension_semantics<parallel>], iteration_bounds = array<i64: 2>, scalar_prefetch = 0 : i64, scratch_operands = 0 : i64, tpu.core_type = #tpu.core_type<tc>, window_params = [{transform_indices = @transform_0, window_bounds = array<i64: 3, 1, 128>}, {pipeline_mode = #tpu.pipeline_mode<synchronous>, transform_indices = @transform_1, window_bounds = array<i64: 8, 128>}, {transform_indices = @transform_2, window_bounds = array<i64: 3, 15, 128>}, {transform_indices = @transform_3, window_bounds = array<i64: 3, 24, 128>}]} {
    %c0 = arith.constant 0 : index
    %c0_0 = arith.constant 0 : index
    %c0_1 = arith.constant 0 : index
    %0 = vector.load %arg1[%c0, %c0_0, %c0_1] : memref<3x1x128xf32, #tpu.memory_space<vmem>>, vector<3x1x128xf32>
    %c0_2 = arith.constant 0 : index
    %c0_3 = arith.constant 0 : index
    %c0_4 = arith.constant 0 : index
    %1 = vector.load %arg4[%c0_2, %c0_3, %c0_4] : memref<3x24x128xf32, #tpu.memory_space<vmem>>, vector<3x1x128xf32>
    tpu.vector_store %arg4[%c0_2, %c0_3, %c0_4], %0 {strides = array<i32>} : memref<3x24x128xf32, #tpu.memory_space<vmem>>, vector<3x1x128xf32>,
    %c0_5 = arith.constant 0 : index
    %c0_6 = arith.constant 0 : index
    %2 = vector.load %arg2[%c0_5, %c0_6] : memref<8x128xf32, #tpu.memory_space<vmem>>, vector<8x128xf32>
    %3 = vector.shape_cast %2 : vector<8x128xf32> to vector<1x8x128xf32>
    %4 = vector.shape_cast %3 : vector<1x8x128xf32> to vector<1x8x128xf32>
    %5 = vector.broadcast %4 : vector<1x8x128xf32> to vector<3x8x128xf32>
    %c0_7 = arith.constant 0 : index
    %c1 = arith.constant 1 : index
    %c0_8 = arith.constant 0 : index
    %6 = vector.load %arg4[%c0_7, %c1, %c0_8] : memref<3x24x128xf32, #tpu.memory_space<vmem>>, vector<3x8x128xf32>
    tpu.vector_store %arg4[%c0_7, %c1, %c0_8], %5 {strides = array<i32>} : memref<3x24x128xf32, #tpu.memory_space<vmem>>, vector<3x8x128xf32>,
    %c0_9 = arith.constant 0 : index
    %c0_10 = arith.constant 0 : index
    %c0_11 = arith.constant 0 : index
    %7 = vector.load %arg3[%c0_9, %c0_10, %c0_11] : memref<3x15x128xf32, #tpu.memory_space<vmem>>, vector<3x15x128xf32>
    %c0_12 = arith.constant 0 : index
    %c9 = arith.constant 9 : index
    %c0_13 = arith.constant 0 : index
    %8 = vector.load %arg4[%c0_12, %c9, %c0_13] : memref<3x24x128xf32, #tpu.memory_space<vmem>>, vector<3x15x128xf32>
    tpu.vector_store %arg4[%c0_12, %c9, %c0_13], %7 {strides = array<i32>} : memref<3x24x128xf32, #tpu.memory_space<vmem>>, vector<3x15x128xf32>,
    return
  }
  func.func @transform_0(%arg0: i32) -> (i32, i32, i32) {
    %c0_i32 = arith.constant 0 : i32
    %c0_i32_0 = arith.constant 0 : i32
    %c0_i32_1 = arith.constant 0 : i32
    return %arg0, %c0_i32, %c0_i32_0 : i32, i32, i32
  }
  func.func @transform_1(%arg0: i32) -> (i32, i32) {
    %c0_i32 = arith.constant 0 : i32
    %c0_i32_0 = arith.constant 0 : i32
    %c0_i32_1 = arith.constant 0 : i32
    return %c0_i32, %c0_i32_0 : i32, i32
  }
  func.func @transform_2(%arg0: i32) -> (i32, i32, i32) {
    %c0_i32 = arith.constant 0 : i32
    %c0_i32_0 = arith.constant 0 : i32
    %c0_i32_1 = arith.constant 0 : i32
    return %arg0, %c0_i32, %c0_i32_0 : i32, i32, i32
  }
  func.func @transform_3(%arg0: i32) -> (i32, i32, i32) {
    %c0_i32 = arith.constant 0 : i32
    %c0_i32_0 = arith.constant 0 : i32
    %c0_i32_1 = arith.constant 0 : i32
    return %arg0, %c0_i32, %c0_i32_0 : i32, i32, i32
  }
}

</mosaic_0001>

<llo_original>
// kernel: tpu_custom_call.1
$region0: #{tpu_custom_call.1}
  #allocation0 [shape = 'u32[]', space=smem, size = 0x4, offset = 0x4, fixed_abs, tag = 'smem constant byte address 0x4 - core index']
  #allocation1 [shape = 'u32[144,128]{1,0:T(1,128)}', space=vmem, size = 0x12000, scoped, tag = 'internal scratch']
  %s0 = inlined_call_operand.hbm [shape: f32[5,1,128], index: 0, kind: input, shape index: {}]
  %s1 = inlined_call_operand.hbm [shape: f32[8,128], index: 1, kind: input, shape index: {}]
  %s2 = inlined_call_operand.hbm [shape: f32[5,15,128], index: 2, kind: input, shape index: {}]
  %s3 = inlined_call_operand.hbm [shape: f32[5,24,128], index: 3, kind: output, shape index: {}]
  %s4 = sld [smem:[#allocation0]]
  $region57: #{tpu_custom_call.1} parent=0
    _
  %s6 = ssub.s32 1, %s4
  %s7 = scalar_select 0, %s6, %s4
  $region1: #{tpu_custom_call.1} parent=0
    #allocation2 [shape = 'u8[3072]{0}', space=vmem, size = 0xc00, scoped, tag = 'input window, operand 0']
    #allocation3 [shape = 's32[2]{0}', space=sflag, size = 0x8, scoped, tag = 'scoped memory for tpu_custom_call.1']
    #allocation4 [shape = 's32[2]{0}', space=sflag, size = 0x8, scoped, tag = 'scoped memory for tpu_custom_call.1']
    #allocation5 [shape = 'u8[4096]{0}', space=vmem, size = 0x1000, scoped, tag = 'input window, operand 1, single buffered']
    #allocation6 [shape = 's32[1]{0}', space=sflag, size = 0x4, scoped, tag = 'scoped memory for tpu_custom_call.1']
    #allocation7 [shape = 'u8[49152]{0}', space=vmem, size = 0xc000, scoped, tag = 'input window, operand 2']
    #allocation8 [shape = 'u8[73728]{0}', space=vmem, size = 0x12000, scoped, tag = 'output window, operand 0']
    %8 = vsyncpa [#allocation3], 0
    %s9 = scalar_lea.sflag [#allocation3], 1
    %10 = vsyncpa %s9, 0
    %11 = vsyncpa [#allocation6], 0
    %12 = vsyncpa [#allocation4], 0
    %s13 = scalar_lea.sflag [#allocation4], 1
    %14 = vsyncpa %s13, 0
    loop: start=0, step=1, limit=4
    $region2: #{tpu_custom_call.1} parent=1 // loop_pre_header
      _
    $region3: #{tpu_custom_call.1} parent=1 // loop_header
      %s16 = sphi 0, %s20
      %p17 = scmp.ge.s32.totalorder %s16, 4
      %s26 = sphi 0, %s28
      %s29 = sphi 0, %s26
      %s30 = sphi 0, %s29
      %s46 = sphi 0, %s30
      %s50 = sphi 0, %s50
      %s52 = sphi 0, %s50
      %s53 = sphi 0, %s52
      %s67 = sphi 0, %s53
      %s73 = sphi 0, %s75
      %s76 = sphi 0, %s73
      %s77 = sphi 0, %s76
      %s93 = sphi 0, %s77
      %s99 = sphi 0, %s101
      %s102 = sphi 0, %s99
      %s103 = sphi 0, %s102
      %s119 = sphi 0, %s103
    $region4: #{tpu_custom_call.1} parent=1 // loop_header_branch
      %19 = sbr.rel (%p17) target = $region8
    $region5: #{tpu_custom_call.1} parent=1 // loop_body
      %s21 = ssub.s32 %s16, 1
      %s22 = ssub.s32 %s16, 2
      %s23 = sadd.s32 %s16, 1
      %s24 = ssub.s32 %s16, %s23
      %p25 = scmp.eq.s32.totalorder %s24, 0
      %s27 = sadd.s32 %s26, 1
      %s28 = scalar_select %p25, %s26, %s27
      %p31 = pneg %p25
      %p32 = scmp.eq.s32.totalorder %s16, 1
      %p33 = por %p31, %p32
      %p34 = scmp.ne.s32.totalorder %s26, %s29
      %p35 = scmp.eq.s32.totalorder %s16, 0
      %p36 = por %p34, %p35
      %p37 = scmp.ne.s32.totalorder %s26, %s29
      %p38 = scmp.eq.s32.totalorder %s21, 1
      %p39 = por %p37, %p38
      %p40 = scmp.ne.s32.totalorder %s29, %s30
      %p41 = scmp.eq.s32.totalorder %s21, 0
      %p42 = por %p40, %p41
      %p43 = scmp.ne.s32.totalorder %s29, %s30
      %p44 = scmp.eq.s32.totalorder %s22, 1
      %p45 = por %p43, %p44
      %p47 = scmp.ne.s32.totalorder %s30, %s46
      %p48 = scmp.eq.s32.totalorder %s22, 0
      %p49 = por %p47, %p48
      %s51 = sadd.s32 %s50, 1
      %p54 = scmp.eq.s32.totalorder %s16, 1
      %p55 = scmp.ne.s32.totalorder %s50, %s52
      %p56 = scmp.eq.s32.totalorder %s16, 0
      %p57 = por %p55, %p56
      %p58 = scmp.ne.s32.totalorder %s50, %s52
      %p59 = scmp.eq.s32.totalorder %s21, 1
      %p60 = por %p58, %p59
      %p61 = scmp.ne.s32.totalorder %s52, %s53
      %p62 = scmp.eq.s32.totalorder %s21, 0
      %p63 = por %p61, %p62
      %p64 = scmp.ne.s32.totalorder %s52, %s53
      %p65 = scmp.eq.s32.totalorder %s22, 1
      %p66 = por %p64, %p65
      %p68 = scmp.ne.s32.totalorder %s53, %s67
      %p69 = scmp.eq.s32.totalorder %s22, 0
      %p70 = por %p68, %p69
      %s71 = ssub.s32 %s16, %s23
      %p72 = scmp.eq.s32.totalorder %s71, 0
      %s74 = sadd.s32 %s73, 1
      %s75 = scalar_select %p72, %s73, %s74
      %p78 = pneg %p72
      %p79 = scmp.eq.s32.totalorder %s16, 1
      %p80 = por %p78, %p79
      %p81 = scmp.ne.s32.totalorder %s73, %s76
      %p82 = scmp.eq.s32.totalorder %s16, 0
      %p83 = por %p81, %p82
      %p84 = scmp.ne.s32.totalorder %s73, %s76
      %p85 = scmp.eq.s32.totalorder %s21, 1
      %p86 = por %p84, %p85
      %p87 = scmp.ne.s32.totalorder %s76, %s77
      %p88 = scmp.eq.s32.totalorder %s21, 0
      %p89 = por %p87, %p88
      %p90 = scmp.ne.s32.totalorder %s76, %s77
      %p91 = scmp.eq.s32.totalorder %s22, 1
      %p92 = por %p90, %p91
      %p94 = scmp.ne.s32.totalorder %s77, %s93
      %p95 = scmp.eq.s32.totalorder %s22, 0
      %p96 = por %p94, %p95
      %s97 = ssub.s32 %s16, %s23
      %p98 = scmp.eq.s32.totalorder %s97, 0
      %s100 = sadd.s32 %s99, 1
      %s101 = scalar_select %p98, %s99, %s100
      %p104 = pneg %p98
      %p105 = scmp.eq.s32.totalorder %s16, 1
      %p106 = por %p104, %p105
      %p107 = scmp.ne.s32.totalorder %s99, %s102
      %p108 = scmp.eq.s32.totalorder %s16, 0
      %p109 = por %p107, %p108
      %p110 = scmp.ne.s32.totalorder %s99, %s102
      %p111 = scmp.eq.s32.totalorder %s21, 1
      %p112 = por %p110, %p111
      %p113 = scmp.ne.s32.totalorder %s102, %s103
      %p114 = scmp.eq.s32.totalorder %s21, 0
      %p115 = por %p113, %p114
      %p116 = scmp.ne.s32.totalorder %s102, %s103
      %p117 = scmp.eq.s32.totalorder %s22, 1
      %p118 = por %p116, %p117
      %p120 = scmp.ne.s32.totalorder %s103, %s119
      %p121 = scmp.eq.s32.totalorder %s22, 0
      %p122 = por %p120, %p121
      %p123 = scmp.le.s32.totalorder 1, %s16
      %p124 = scmp.lt.s32.totalorder %s16, 3
      %p125 = pnand %p123, %p124
      %p126 = pneg %p125
      // Predicated region
      $region9: #{tpu_custom_call.1} parent=5 // pred_check
        _
      $region10: #{tpu_custom_call.1} parent=5 // pred_check_branch
        %128 = sbr.rel (%p125) target = $region12
      $region11: #{tpu_custom_call.1} parent=5 // pred_region
        %s129 = ssub.s32 %s16, 1
        // Predicated region
        $region13: #{tpu_custom_call.1} parent=11 // pred_check
          %p130 = pneg %p63
        $region14: #{tpu_custom_call.1} parent=11 // pred_check_branch
          %132 = sbr.rel (%p130) target = $region16
        $region15: #{tpu_custom_call.1} parent=11 // pred_region
          %s134 = ssub.s32 128, 128
          %135 = vsyncadd [#allocation6], %s134
          %s137 = sshll.u32 [#allocation5], 4
          %s138 = int_to_ptr.vmem [resolvable:$true] %s137
          %140 = dma.hbm_to_vmem [thread:$0]  %s1, 128, %s138, [#allocation6]
        $region16: #{tpu_custom_call.1} parent=11 // pred_fallthru
          _
      $region12: #{tpu_custom_call.1} parent=5 // pred_fallthru
        _
      %p141 = scmp.lt.s32.totalorder %s16, 2
      // Predicated region
      $region17: #{tpu_custom_call.1} parent=5 // pred_check
        %p142 = pneg %p141
      $region18: #{tpu_custom_call.1} parent=5 // pred_check_branch
        %144 = sbr.rel (%p142) target = $region20
      $region19: #{tpu_custom_call.1} parent=5 // pred_region
        // Predicated region
        $region21: #{tpu_custom_call.1} parent=19 // pred_check
          %p145 = pneg %p36
        $region22: #{tpu_custom_call.1} parent=19 // pred_check_branch
          %147 = sbr.rel (%p145) target = $region24
        $region23: #{tpu_custom_call.1} parent=19 // pred_region
          %s148 = sand.u32 %s16, 1
          %s149 = scalar_lea.sflag [#allocation3], %s148
          %s150 = sand.u32 %s26, 1
          %s151 = smul.addr %s150, 3
          %s152 = scalar_lea.vmem [#allocation2], %s151
          %s153 = smul.u32 3, %s16
          %s154 = ssub.s32 5, %s153
          %p155 = scmp.lt.s32.totalorder %s154, 3
          %s156 = scalar_select %p155, %s154, 3
          %s157 = smul.u32 16, %s156
          %s159 = ssub.s32 48, %s157
          %160 = vsyncadd %s149, %s159
          %p161 = scmp.ne.s32.totalorder 0, %s157
          %s162 = smul.addr %s153, 16
          %s163 = scalar_lea.hbm %s0, %s162
          %s164 = sshll.u32 %s152, 4
          %s165 = int_to_ptr.vmem [resolvable:$true] %s164
          %s166 = sshll.u32 %s156, 4
          %170 = dma.hbm_to_vmem [thread:$0]  (%p161), %s163, %s166, %s165, %s149, 16, 16, 1
        $region24: #{tpu_custom_call.1} parent=19 // pred_fallthru
          _
        // Predicated region
        $region25: #{tpu_custom_call.1} parent=19 // pred_check
          %p171 = pneg %p83
        $region26: #{tpu_custom_call.1} parent=19 // pred_check_branch
          %173 = sbr.rel (%p171) target = $region28
        $region27: #{tpu_custom_call.1} parent=19 // pred_region
          %s174 = sand.u32 %s16, 1
          %s175 = scalar_lea.sflag [#allocation3], %s174
          %s176 = sand.u32 %s73, 1
          %s177 = smul.addr %s176, 48
          %s178 = scalar_lea.vmem [#allocation7], %s177
          %s179 = smul.u32 3, %s16
          %s180 = ssub.s32 5, %s179
          %p181 = scmp.lt.s32.totalorder %s180, 3
          %s182 = scalar_select %p181, %s180, 3
          %s183 = smul.u32 128, %s182
          %s184 = smul.u32 %s183, 2
          %s186 = ssub.s32 768, %s184
          %187 = vsyncadd %s175, %s186
          %p188 = scmp.ne.s32.totalorder 0, %s184
          %s189 = smul.addr %s179, 2
          %s190 = smul.addr %s189, 128
          %s191 = scalar_lea.hbm %s2, %s190
          %s192 = smul.u32 %s182, 2
          %s193 = smul.u32 8, %s192
          %s194 = sshll.u32 %s178, 4
          %s195 = int_to_ptr.vmem [resolvable:$true] %s194
          %s196 = sshll.u32 %s193, 4
          %200 = dma.hbm_to_vmem [thread:$0]  (%p188), %s191, %s196, %s195, %s175, 128, 128, 8
        $region28: #{tpu_custom_call.1} parent=19 // pred_fallthru
          _
      $region20: #{tpu_custom_call.1} parent=5 // pred_fallthru
        _
      %p201 = scmp.le.s32.totalorder 1, %s16
      %p202 = scmp.lt.s32.totalorder %s16, 3
      %p203 = pnand %p201, %p202
      %p204 = pneg %p203
      // Predicated region
      $region29: #{tpu_custom_call.1} parent=5 // pred_check
        _
      $region30: #{tpu_custom_call.1} parent=5 // pred_check_branch
        %206 = sbr.rel (%p203) target = $region32
      $region31: #{tpu_custom_call.1} parent=5 // pred_region
        %s207 = ssub.s32 %s16, 1
        %s208 = sand.u32 %s21, 1
        %s209 = scalar_lea.sflag [#allocation3], %s208
        %s210 = sand.u32 %s29, 1
        %s211 = smul.addr %s210, 3
        %s212 = scalar_lea.vmem [#allocation2], %s211
        // Predicated region
        $region33: #{tpu_custom_call.1} parent=31 // pred_check
          %p213 = pneg %p42
        $region34: #{tpu_custom_call.1} parent=31 // pred_check_branch
          %215 = sbr.rel (%p213) target = $region36
        $region35: #{tpu_custom_call.1} parent=31 // pred_region
          %216 = dma.done %s209, 48
        $region36: #{tpu_custom_call.1} parent=31 // pred_fallthru
          _
        // Predicated region
        $region37: #{tpu_custom_call.1} parent=31 // pred_check
          %p217 = pneg %p63
        $region38: #{tpu_custom_call.1} parent=31 // pred_check_branch
          %219 = sbr.rel (%p217) target = $region40
        $region39: #{tpu_custom_call.1} parent=31 // pred_region
          %220 = dma.done [#allocation6], 128
        $region40: #{tpu_custom_call.1} parent=31 // pred_fallthru
          _
        %s221 = sand.u32 %s21, 1
        %s222 = scalar_lea.sflag [#allocation3], %s221
        %s223 = sand.u32 %s76, 1
        %s224 = smul.addr %s223, 48
        %s225 = scalar_lea.vmem [#allocation7], %s224
        // Predicated region
        $region41: #{tpu_custom_call.1} parent=31 // pred_check
          %p226 = pneg %p89
        $region42: #{tpu_custom_call.1} parent=31 // pred_check_branch
          %228 = sbr.rel (%p226) target = $region44
        $region43: #{tpu_custom_call.1} parent=31 // pred_region
          %229 = dma.done %s222, 768
        $region44: #{tpu_custom_call.1} parent=31 // pred_fallthru
          _
        %s230 = sand.u32 %s21, 1
        %s231 = scalar_lea.sflag [#allocation3], %s230
        %s232 = sand.u32 %s29, 1
        %s233 = smul.addr %s232, 3
        %s234 = scalar_lea.vmem [#allocation2], %s233
        %p235 = pneg %p42
        %p236 = pneg %p39
        %p237 = pneg %p63
        %p238 = pneg %p60
        %s239 = sand.u32 %s21, 1
        %s240 = scalar_lea.sflag [#allocation3], %s239
        %s241 = sand.u32 %s76, 1
        %s242 = smul.addr %s241, 48
        %s243 = scalar_lea.vmem [#allocation7], %s242
        %p244 = pneg %p89
        %p245 = pneg %p86
        %p246 = pneg %p115
        %p247 = pneg %p112
        %s248 = sand.u32 %s102, 1
        %s249 = scalar_lea.sflag [#allocation4], %s248
        %s250 = sand.u32 %s102, 1
        %s251 = smul.addr %s250, 72
        %s252 = scalar_lea.vmem [#allocation8], %s251
        %s253 = smul.u32 3, %s21
        %s254 = ssub.s32 5, %s253
        %p255 = scmp.lt.s32.totalorder %s254, 3
        %s256 = scalar_select %p255, %s254, 3
        %s257 = smul.u32 16, %s256
        %s258 = smul.u32 3, %s21
        %s259 = ssub.s32 5, %s258
        %p260 = scmp.lt.s32.totalorder %s259, 3
        %s261 = scalar_select %p260, %s259, 3
        %s262 = smul.u32 128, %s261
        %s263 = smul.u32 %s262, 2
        %s264 = smul.u32 3, %s21
        %s265 = ssub.s32 5, %s264
        %p266 = scmp.lt.s32.totalorder %s265, 3
        %s267 = scalar_select %p266, %s265, 3
        %s268 = smul.u32 128, %s267
        %s269 = smul.u32 %s268, 3
        %v270 = vld [vmem:[%s212] sm:$0x1]
        %v271 = vld [vmem:[%s212 + $0x1] sm:$0x1]
        %v272 = vld [vmem:[%s212 + $0x2] sm:$0x1]
        %273 = vst [vmem:[%s252] sm:$0x1] %v270
        %274 = vst [vmem:[%s252 + $0x18] sm:$0x1] %v271
        %275 = vst [vmem:[%s252 + $0x30] sm:$0x1] %v272
        %v276 = vld [vmem:[#allocation5] sm:$0xff]
        %277 = vst [vmem:[%s252 + $0x1] sm:$0xff] %v276
        %278 = vst [vmem:[%s252 + $0x19] sm:$0xff] %v276
        %279 = vst [vmem:[%s252 + $0x31] sm:$0xff] %v276
        %v280 = vld [vmem:[%s225] sm:$0xff]
        %v281 = vld [vmem:[%s225 + $0x8] sm:$0x7f]
        %v282 = vld [vmem:[%s225 + $0x10] sm:$0xff]
        %v283 = vld [vmem:[%s225 + $0x18] sm:$0x7f]
        %v284 = vld [vmem:[%s225 + $0x20] sm:$0xff]
        %v285 = vld [vmem:[%s225 + $0x28] sm:$0x7f]
        %286 = vst [vmem:[%s252 + $0x9] sm:$0xff] %v280
        %287 = vst [vmem:[%s252 + $0x11] sm:$0x7f] %v281
        %288 = vst [vmem:[%s252 + $0x21] sm:$0xff] %v282
        %289 = vst [vmem:[%s252 + $0x29] sm:$0x7f] %v283
        %290 = vst [vmem:[%s252 + $0x39] sm:$0xff] %v284
        %291 = vst [vmem:[%s252 + $0x41] sm:$0x7f] %v285
        %s292 = sand.u32 %s102, 1
        %s293 = scalar_lea.sflag [#allocation4], %s292
        %s294 = sand.u32 %s102, 1
        %s295 = smul.addr %s294, 72
        %s296 = scalar_lea.vmem [#allocation8], %s295
        // Predicated region
        $region45: #{tpu_custom_call.1} parent=31 // pred_check
          %p297 = pneg %p112
        $region46: #{tpu_custom_call.1} parent=31 // pred_check_branch
          %299 = sbr.rel (%p297) target = $region48
        $region47: #{tpu_custom_call.1} parent=31 // pred_region
          %s300 = smul.u32 3, %s21
          %s301 = ssub.s32 5, %s300
          %p302 = scmp.lt.s32.totalorder %s301, 3
          %s303 = scalar_select %p302, %s301, 3
          %s304 = smul.u32 128, %s303
          %s305 = smul.u32 %s304, 3
          %s307 = ssub.s32 1152, %s305
          %308 = vsyncadd %s293, %s307
          %p309 = scmp.ne.s32.totalorder 0, %s305
          %s310 = smul.addr %s300, 3
          %s311 = smul.addr %s310, 128
          %s312 = scalar_lea.hbm %s3, %s311
          %s313 = smul.u32 %s303, 3
          %s314 = smul.u32 8, %s313
          %s315 = sshll.u32 %s296, 4
          %s316 = int_to_ptr.vmem [resolvable:$true] %s315
          %s317 = sshll.u32 %s314, 4
          %321 = dma.vmem_to_hbm [thread:$0]  (%p309), %s316, %s317, %s312, %s293, 128, 128, 8
        $region48: #{tpu_custom_call.1} parent=31 // pred_fallthru
          _
      $region32: #{tpu_custom_call.1} parent=5 // pred_fallthru
        _
      %p322 = scmp.le.s32.totalorder 2, %s16
      // Predicated region
      $region49: #{tpu_custom_call.1} parent=5 // pred_check
        %p323 = pneg %p322
      $region50: #{tpu_custom_call.1} parent=5 // pred_check_branch
        %325 = sbr.rel (%p323) target = $region52
      $region51: #{tpu_custom_call.1} parent=5 // pred_region
        %s326 = ssub.s32 %s16, 2
        // Predicated region
        $region53: #{tpu_custom_call.1} parent=51 // pred_check
          %p327 = pneg %p118
        $region54: #{tpu_custom_call.1} parent=51 // pred_check_branch
          %329 = sbr.rel (%p327) target = $region56
        $region55: #{tpu_custom_call.1} parent=51 // pred_region
          %s330 = sand.u32 %s103, 1
          %s331 = scalar_lea.sflag [#allocation4], %s330
          %s332 = sand.u32 %s103, 1
          %s333 = smul.addr %s332, 72
          %s334 = scalar_lea.vmem [#allocation8], %s333
          %335 = dma.done %s331, 1152
        $region56: #{tpu_custom_call.1} parent=51 // pred_fallthru
          _
      $region52: #{tpu_custom_call.1} parent=5 // pred_fallthru
        _
    $region6: #{tpu_custom_call.1} parent=1 // loop_footer
      %s20 = sadd.s32 1, %s16
    $region7: #{tpu_custom_call.1} parent=1 // loop_footer_branch
      %15 = sbr.rel target = $region3
    $region8: #{tpu_custom_call.1} parent=1 // loop_exit
      _
    %336 = vsyncpa [#allocation3], 1
    %s337 = scalar_lea.sflag [#allocation3], 1
    %338 = vsyncpa %s337, 1
    %339 = vsyncpa [#allocation6], 1
    %340 = vsyncpa [#allocation4], 1
    %s341 = scalar_lea.sflag [#allocation4], 1
    %342 = vsyncpa %s341, 1

</llo_original>
